<compile_context>
chip_gen: v5e
topology: v5e:2x2
jax: 0.10.0
libtpu: 0.0.40
codegen_flags: <defaults>
</compile_context>

<pallas_src>
import functools

import jax
import jax.numpy as jnp
from jax.experimental import pallas as pl
from jax.experimental.pallas import tpu as pltpu

_LANES = 128
_SUBLANES = 8


def _triplet_loss_kernel(a_ref, p_ref, n_ref, out_ref, *, margin, batch, tile_b):
    i = pl.program_id(0)

    a = a_ref[...].astype(jnp.float32)
    p = p_ref[...].astype(jnp.float32)
    n = n_ref[...].astype(jnp.float32)

    dp = a - p
    dn = a - n
    # Fused single cross-lane reduction: sum_d[(a-p)^2 - (a-n)^2] -> (tile_b, 1)
    diff = jnp.sum(dp * dp - dn * dn, axis=1, keepdims=True)
    losses = jnp.maximum(diff + margin, 0.0)

    # Mask rows past the true batch size (last tile may be partial / OOB).
    row = i * tile_b + jax.lax.broadcasted_iota(jnp.int32, (tile_b, 1), 0)
    losses = jnp.where(row < batch, losses, 0.0)

    # Per-tile partial sum, replicated into one full (8, 128) vreg so the
    # output store is lane-dense / unmasked and the grid axis can be parallel.
    partial = jnp.sum(losses, keepdims=True)                  # (1, 1)
    out_ref[...] = jnp.broadcast_to(partial, (_SUBLANES, _LANES))


def _choose_tile_b(batch, dim, itemsize):
    # Target ~2 MiB per input tile: 3 inputs x 2 pipeline buffers ~= 12 MiB,
    # which is safe under the default scoped-VMEM limit on v5e/v6e/v7x.
    target = max(_SUBLANES, (2 * 1024 * 1024) // max(1, dim * itemsize))
    tile = min(batch, target)
    if tile >= batch:
        return batch                                  # one full-batch block
    return max(_SUBLANES, (tile // _SUBLANES) * _SUBLANES)  # sublane-aligned


def triplet_loss(anchor, positive, negative, margin: float = 1.0):
    """Pallas TPU TripletLoss.forward: mean(relu(||a-p||^2 - ||a-n||^2 + margin))."""
    B, D = anchor.shape
    assert positive.shape == (B, D) and negative.shape == (B, D)

    tile_b = _choose_tile_b(B, D, jnp.dtype(anchor.dtype).itemsize)
    num_tiles = pl.cdiv(B, tile_b)

    kernel = functools.partial(
        _triplet_loss_kernel, margin=float(margin), batch=B, tile_b=tile_b
    )

    partials = pl.pallas_call(
        kernel,
        out_shape=jax.ShapeDtypeStruct((num_tiles * _SUBLANES, _LANES), jnp.float32),
        grid=(num_tiles,),
        in_specs=[
            pl.BlockSpec((tile_b, D), lambda i: (i, 0)),
            pl.BlockSpec((tile_b, D), lambda i: (i, 0)),
            pl.BlockSpec((tile_b, D), lambda i: (i, 0)),
        ],
        out_specs=pl.BlockSpec((_SUBLANES, _LANES), lambda i: (i, 0)),
        compiler_params=pltpu.CompilerParams(
            dimension_semantics=("parallel",),
        ),
    )(anchor, positive, negative)

    # Tiny final reduction over per-tile partial sums in plain JAX.
    per_tile = partials.reshape(num_tiles, _SUBLANES, _LANES)[:, 0, 0]  # (num_tiles,)
    return jnp.sum(per_tile) / B


if __name__ == "__main__":
    key = jax.random.PRNGKey(0)
    k1, k2, k3 = jax.random.split(key, 3)
    B, D = 8, 32
    anchor = jax.random.normal(k1, (B, D), dtype=jnp.float32)
    positive = jax.random.normal(k2, (B, D), dtype=jnp.float32)
    negative = jax.random.normal(k3, (B, D), dtype=jnp.float32)

    loss = triplet_loss(anchor, positive, negative, margin=1.0)
    jax.block_until_ready(loss)

    # Reference check in plain JAX (matches the PyTorch module's math exactly).
    pos_d = jnp.sum((anchor - positive) ** 2, axis=1)
    neg_d = jnp.sum((anchor - negative) ** 2, axis=1)
    ref = jnp.mean(jnp.maximum(pos_d - neg_d + 1.0, 0.0))
    assert jnp.allclose(loss, ref, rtol=1e-5, atol=1e-5), (loss, ref)

    print("KERNEL_OK")
</pallas_src>

<mosaic_0001>
module attributes {stable_mosaic.version = 11 : i64} {
  func.func @_triplet_loss_kernel(%arg0: i32, %arg1: memref<8x32xf32, #tpu.memory_space<vmem>>, %arg2: memref<8x32xf32, #tpu.memory_space<vmem>>, %arg3: memref<8x32xf32, #tpu.memory_space<vmem>>, %arg4: memref<8x128xf32, #tpu.memory_space<vmem>>) attributes {dimension_semantics = [#tpu.dimension_semantics<parallel>], iteration_bounds = array<i64: 1>, scalar_prefetch = 0 : i64, scratch_operands = 0 : i64, tpu.core_type = #tpu.core_type<tc>, window_params = [{transform_indices = @transform_0, window_bounds = array<i64: 8, 32>}, {transform_indices = @transform_1, window_bounds = array<i64: 8, 32>}, {transform_indices = @transform_2, window_bounds = array<i64: 8, 32>}, {transform_indices = @transform_3, window_bounds = array<i64: 8, 128>}]} {
    %c0 = arith.constant 0 : index
    %c0_0 = arith.constant 0 : index
    %0 = vector.load %arg1[%c0, %c0_0] : memref<8x32xf32, #tpu.memory_space<vmem>>, vector<8x32xf32>
    %c0_1 = arith.constant 0 : index
    %c0_2 = arith.constant 0 : index
    %1 = vector.load %arg2[%c0_1, %c0_2] : memref<8x32xf32, #tpu.memory_space<vmem>>, vector<8x32xf32>
    %c0_3 = arith.constant 0 : index
    %c0_4 = arith.constant 0 : index
    %2 = vector.load %arg3[%c0_3, %c0_4] : memref<8x32xf32, #tpu.memory_space<vmem>>, vector<8x32xf32>
    %3 = arith.subf %0, %1 : vector<8x32xf32>
    %4 = arith.subf %0, %2 : vector<8x32xf32>
    %5 = arith.mulf %3, %3 : vector<8x32xf32>
    %6 = arith.mulf %4, %4 : vector<8x32xf32>
    %7 = arith.subf %5, %6 : vector<8x32xf32>
    %cst = arith.constant dense<0.000000e+00> : vector<8xf32>
    %8 = vector.multi_reduction <add>, %7, %cst [1] : vector<8x32xf32> to vector<8xf32>
    %9 = vector.shape_cast %8 : vector<8xf32> to vector<8x1xf32>
    %cst_5 = arith.constant 1.000000e+00 : f32
    %10 = vector.broadcast %cst_5 : f32 to vector<8x1xf32>
    %11 = arith.addf %9, %10 : vector<8x1xf32>
    %cst_6 = arith.constant 0.000000e+00 : f32
    %12 = vector.broadcast %cst_6 : f32 to vector<8x1xf32>
    %13 = arith.maximumf %11, %12 : vector<8x1xf32>
    %c8_i32 = arith.constant 8 : i32
    %14 = arith.muli %arg0, %c8_i32 : i32
    %15 = tpu.iota {dimensions = array<i32: 0>} : vector<8x1xi32>
    %16 = vector.broadcast %14 : i32 to vector<8x1xi32>
    %17 = arith.addi %16, %15 : vector<8x1xi32>
    %c8_i32_7 = arith.constant 8 : i32
    %18 = vector.broadcast %c8_i32_7 : i32 to vector<8x1xi32>
    %19 = arith.cmpi slt, %17, %18 : vector<8x1xi32>
    %cst_8 = arith.constant 0.000000e+00 : f32
    %20 = vector.broadcast %cst_8 : f32 to vector<8x1xf32>
    %21 = arith.select %19, %13, %20 : vector<8x1xi1>, vector<8x1xf32>
    %22 = vector.shape_cast %21 : vector<8x1xf32> to vector<1x8x1xf32>
    %cst_9 = arith.constant dense<0.000000e+00> : vector<1xf32>
    %23 = vector.multi_reduction <add>, %22, %cst_9 [1, 2] : vector<1x8x1xf32> to vector<1xf32>
    %24 = vector.shape_cast %23 : vector<1xf32> to vector<1x1x1xf32>
    %25 = vector.extract %24[0, 0, 0] : f32 from vector<1x1x1xf32>
    %26 = vector.broadcast %25 : f32 to vector<1x1xf32>
    %27 = vector.shape_cast %26 : vector<1x1xf32> to vector<1x1xf32>
    %28 = vector.broadcast %27 : vector<1x1xf32> to vector<8x128xf32>
    %c0_10 = arith.constant 0 : index
    %c0_11 = arith.constant 0 : index
    %29 = vector.load %arg4[%c0_10, %c0_11] : memref<8x128xf32, #tpu.memory_space<vmem>>, vector<8x128xf32>
    tpu.vector_store %arg4[%c0_10, %c0_11], %28 {strides = array<i32>} : memref<8x128xf32, #tpu.memory_space<vmem>>, vector<8x128xf32>,
    return
  }
  func.func @transform_0(%arg0: i32) -> (i32, i32) {
    %c0_i32 = arith.constant 0 : i32
    %c0_i32_0 = arith.constant 0 : i32
    return %arg0, %c0_i32 : i32, i32
  }
  func.func @transform_1(%arg0: i32) -> (i32, i32) {
    %c0_i32 = arith.constant 0 : i32
    %c0_i32_0 = arith.constant 0 : i32
    return %arg0, %c0_i32 : i32, i32
  }
  func.func @transform_2(%arg0: i32) -> (i32, i32) {
    %c0_i32 = arith.constant 0 : i32
    %c0_i32_0 = arith.constant 0 : i32
    return %arg0, %c0_i32 : i32, i32
  }
  func.func @transform_3(%arg0: i32) -> (i32, i32) {
    %c0_i32 = arith.constant 0 : i32
    %c0_i32_0 = arith.constant 0 : i32
    return %arg0, %c0_i32 : i32, i32
  }
}

</mosaic_0001>

<llo_original>
// kernel: tpu_custom_call.1
$region0: #{tpu_custom_call.1}
  #allocation0 [shape = 'u32[]', space=smem, size = 0x4, offset = 0x4, fixed_abs, tag = 'smem constant byte address 0x4 - core index']
  #allocation1 [shape = 'u32[72,128]{1,0:T(1,128)}', space=vmem, size = 0x9000, scoped, tag = 'internal scratch']
  %s0 = inlined_call_operand.hbm [shape: f32[8,32], index: 0, kind: input, shape index: {}]
  %s1 = inlined_call_operand.hbm [shape: f32[8,32], index: 1, kind: input, shape index: {}]
  %s2 = inlined_call_operand.hbm [shape: f32[8,32], index: 2, kind: input, shape index: {}]
  %s3 = inlined_call_operand.hbm [shape: f32[8,128], index: 3, kind: output, shape index: {}]
  %s4 = sld [smem:[#allocation0]]
  $region34: #{tpu_custom_call.1} parent=0
    _
  %s6 = ssub.s32 1, %s4
  %s7 = scalar_select 0, %s6, %s4
  $region1: #{tpu_custom_call.1} parent=0
    #allocation2 [shape = 'u8[4096]{0}', space=vmem, size = 0x1000, scoped, tag = 'input window, operand 0, single buffered']
    #allocation3 [shape = 's32[1]{0}', space=sflag, size = 0x4, scoped, tag = 'scoped memory for tpu_custom_call.1']
    #allocation4 [shape = 's32[1]{0}', space=sflag, size = 0x4, scoped, tag = 'scoped memory for tpu_custom_call.1']
    #allocation5 [shape = 'u8[4096]{0}', space=vmem, size = 0x1000, scoped, tag = 'input window, operand 1, single buffered']
    #allocation6 [shape = 's32[1]{0}', space=sflag, size = 0x4, scoped, tag = 'scoped memory for tpu_custom_call.1']
    #allocation7 [shape = 'u8[4096]{0}', space=vmem, size = 0x1000, scoped, tag = 'input window, operand 2, single buffered']
    #allocation8 [shape = 'u8[4096]{0}', space=vmem, size = 0x1000, scoped, tag = 'output window, operand 0, single buffered']
    %8 = vsyncpa [#allocation3], 0
    %9 = vsyncpa [#allocation6], 0
    %10 = vsyncpa [#allocation4], 0
    // Predicated region
    $region2: #{tpu_custom_call.1} parent=1 // pred_check
      _
    $region3: #{tpu_custom_call.1} parent=1 // pred_check_branch
      %12 = sbr.rel (0) target = $region5
    $region4: #{tpu_custom_call.1} parent=1 // pred_region
      %14 = vsyncadd [#allocation3], 0
      %s16 = sshll.u32 %s0, 4
      %s17 = int_to_ptr.hbm [resolvable:$true] %s16
      %s18 = sshll.u32 [#allocation2], 4
      %s19 = int_to_ptr.vmem [resolvable:$true] %s18
      %21 = dma.hbm_to_vmem [thread:$0]  %s17, 128, %s19, [#allocation3]
    $region5: #{tpu_custom_call.1} parent=1 // pred_fallthru
      _
    // Predicated region
    $region6: #{tpu_custom_call.1} parent=1 // pred_check
      _
    $region7: #{tpu_custom_call.1} parent=1 // pred_check_branch
      %23 = sbr.rel (0) target = $region9
    $region8: #{tpu_custom_call.1} parent=1 // pred_region
      %25 = vsyncadd [#allocation6], 0
      %s27 = sshll.u32 %s1, 4
      %s28 = int_to_ptr.hbm [resolvable:$true] %s27
      %s29 = sshll.u32 [#allocation5], 4
      %s30 = int_to_ptr.vmem [resolvable:$true] %s29
      %32 = dma.hbm_to_vmem [thread:$0]  %s28, 128, %s30, [#allocation6]
    $region9: #{tpu_custom_call.1} parent=1 // pred_fallthru
      _
    // Predicated region
    $region10: #{tpu_custom_call.1} parent=1 // pred_check
      _
    $region11: #{tpu_custom_call.1} parent=1 // pred_check_branch
      %34 = sbr.rel (0) target = $region13
    $region12: #{tpu_custom_call.1} parent=1 // pred_region
      %36 = vsyncadd [#allocation6], 0
      %s38 = sshll.u32 %s2, 4
      %s39 = int_to_ptr.hbm [resolvable:$true] %s38
      %s40 = sshll.u32 [#allocation7], 4
      %s41 = int_to_ptr.vmem [resolvable:$true] %s40
      %43 = dma.hbm_to_vmem [thread:$0]  %s39, 128, %s41, [#allocation6]
    $region13: #{tpu_custom_call.1} parent=1 // pred_fallthru
      _
    // Predicated region
    $region14: #{tpu_custom_call.1} parent=1 // pred_check
      _
    $region15: #{tpu_custom_call.1} parent=1 // pred_check_branch
      %45 = sbr.rel (0) target = $region17
    $region16: #{tpu_custom_call.1} parent=1 // pred_region
      %47 = dma.done [#allocation3], 128
    $region17: #{tpu_custom_call.1} parent=1 // pred_fallthru
      _
    // Predicated region
    $region18: #{tpu_custom_call.1} parent=1 // pred_check
      _
    $region19: #{tpu_custom_call.1} parent=1 // pred_check_branch
      %49 = sbr.rel (0) target = $region21
    $region20: #{tpu_custom_call.1} parent=1 // pred_region
      %51 = dma.done [#allocation6], 128
    $region21: #{tpu_custom_call.1} parent=1 // pred_fallthru
      _
    // Predicated region
    $region22: #{tpu_custom_call.1} parent=1 // pred_check
      _
    $region23: #{tpu_custom_call.1} parent=1 // pred_check_branch
      %53 = sbr.rel (0) target = $region25
    $region24: #{tpu_custom_call.1} parent=1 // pred_region
      %55 = dma.done [#allocation6], 128
    $region25: #{tpu_custom_call.1} parent=1 // pred_fallthru
      _
    %v56 = vld [vmem:[#allocation2] sm:$0xff]
    %v57 = vld [vmem:[#allocation5] sm:$0xff]
    %v58 = vld [vmem:[#allocation7] sm:$0xff]
    %v59 = vsub.f32 %v56, %v57
    %v60 = vsub.f32 %v56, %v58
    %v61 = vmul.f32 %v59, %v59
    %v62 = vmul.f32 %v60, %v60
    %v63 = vsub.f32 %v61, %v62
    %vm64 = vcmask 261120
    %v65 = vsel %vm64, %v63, 0.0
    %66 = vadd.xlane.f32.xlu0 %v65
    %v67 = vpop.xlane.xlu0 %66
    %v68 = vadd.f32 %v67, 1.0
    %v69 = vmax.f32 %v68, 0.0
    %s70 = smul.u32 0, 8
    %v71 = vlaneseq
    %v72 = vshrl.u32 %v71, 7
    %v73 = vstv %s70
    %v74 = vadd.s32 %v73, %v72
    %vm75 = vcmp.lt.s32.totalorder %v74, 8
    %v76 = vsel %vm75, %v69, 0.0
    %vm77 = vcmask 7168
    %v78 = vsel %vm77, %v76, 0.0
    %79 = vadd.xlane.f32.xlu0 %v78
    %v80 = vpop.xlane.xlu0 %79
    %v81 = vrot.slane %v80, 4
    %v82 = vadd.f32 %v80, %v81
    %v83 = vrot.slane %v82, 2
    %v84 = vadd.f32 %v82, %v83
    %v85 = vrot.slane %v84, 1
    %v86 = vadd.f32 %v84, %v85
    %s87 = vtos %v86
    %v88 = vstv %s87
    %89 = vst [vmem:[#allocation8] sm:$0xff] %v88
    // Predicated region
    $region26: #{tpu_custom_call.1} parent=1 // pred_check
      _
    $region27: #{tpu_custom_call.1} parent=1 // pred_check_branch
      %91 = sbr.rel (0) target = $region29
    $region28: #{tpu_custom_call.1} parent=1 // pred_region
      %93 = vsyncadd [#allocation4], 0
      %s95 = sshll.u32 [#allocation8], 4
      %s96 = int_to_ptr.vmem [resolvable:$true] %s95
      %s97 = sshll.u32 %s3, 4
      %s98 = int_to_ptr.hbm [resolvable:$true] %s97
      %100 = dma.vmem_to_hbm [thread:$0]  %s96, 128, %s98, [#allocation4]
    $region29: #{tpu_custom_call.1} parent=1 // pred_fallthru
      _
    // Predicated region
    $region30: #{tpu_custom_call.1} parent=1 // pred_check
      _
    $region31: #{tpu_custom_call.1} parent=1 // pred_check_branch
      %102 = sbr.rel (0) target = $region33
    $region32: #{tpu_custom_call.1} parent=1 // pred_region
      %104 = dma.done [#allocation4], 128
    $region33: #{tpu_custom_call.1} parent=1 // pred_fallthru
      _
    %105 = vsyncpa [#allocation3], 1
    %106 = vsyncpa [#allocation6], 1
    %107 = vsyncpa [#allocation4], 1

</llo_original>
